<compile_context>
chip_gen: v7x
topology: tpu7x:2x2x1
jax: 0.10.0
libtpu: 0.0.40
codegen_flags: <defaults>
</compile_context>

<pallas_src>
import jax
import jax.numpy as jnp
from jax import lax
from jax.experimental import pallas as pl
from jax.experimental.pallas import tpu as pltpu


# ----------------------------------------------------------------------------- kernels


def _gram_dot_kernel(cidx_ref, pidx_ref, gram_ref, w_ref, b_ref, out_ref):
    """Fused-gather path: gram[c, p] = cust_table[c] . prod_table[p].

       cidx_ref : VMEM (1, B_TILE) int32   customer ids (batch on lanes)
       pidx_ref : VMEM (1, B_TILE) int32   product  ids (batch on lanes)
       gram_ref : VMEM (Vc, Vp)    f32/bf16  precomputed gram matrix
       w_ref    : SMEM (1, 1)      f32     nn.Linear(1,1).weight
       b_ref    : SMEM (1,)        f32     nn.Linear(1,1).bias
       out_ref  : VMEM (1, B_TILE) f32     lane-dense output row
    """
    b_tile = out_ref.shape[1]
    v_c, v_p = gram_ref.shape

    c_idx = cidx_ref[...]                                     # (1, B_TILE) i32
    p_idx = pidx_ref[...]                                     # (1, B_TILE) i32

    # One shared iota (vocab on sublanes, batch on lanes), sliced for both compares.
    iota = lax.broadcasted_iota(jnp.int32, (max(v_c, v_p), b_tile), 0)

    # Select column p_idx[i] of G for each batch lane via one small MXU matmul.
    p_onehot = (iota[:v_p] == p_idx).astype(gram_ref.dtype)   # (Vp, B_TILE)
    gp = jnp.dot(gram_ref[...], p_onehot,
                 preferred_element_type=jnp.float32)          # (Vc, B_TILE)

    # Select row c_idx[i]: mask + sublane reduce (VPU/XLU, no second matmul).
    c_mask = iota[:v_c] == c_idx                              # (Vc, B_TILE)
    dots = jnp.sum(jnp.where(c_mask, gp, 0.0), axis=0, keepdims=True)  # (1, B_TILE)

    # Fused Linear(1,1); single unmasked lane-dense store.
    out_ref[...] = dots * w_ref[0, 0] + b_ref[0]


def _table_dot_kernel(cidx_ref, pidx_ref, custT_ref, prodT_ref, w_ref, b_ref,
                      out_ref):
    """General path: one-hot MXU gather from both (transposed) tables.

       custT_ref: VMEM (F, Vc)  f32/bf16   customer table, transposed
       prodT_ref: VMEM (F, Vp)  f32/bf16   product  table, transposed
    """
    b_tile = out_ref.shape[1]
    v_c = custT_ref.shape[1]
    v_p = prodT_ref.shape[1]

    c_idx = cidx_ref[...]                                     # (1, B_TILE) i32
    p_idx = pidx_ref[...]                                     # (1, B_TILE) i32

    # Shared iota; one-hots cast directly to the matmul operand dtype (0/1 exact).
    iota = lax.broadcasted_iota(jnp.int32, (max(v_c, v_p), b_tile), 0)
    c_onehot = (iota[:v_c] == c_idx).astype(custT_ref.dtype)  # (Vc, B_TILE)
    p_onehot = (iota[:v_p] == p_idx).astype(prodT_ref.dtype)  # (Vp, B_TILE)

    c_blk = jnp.dot(custT_ref[...], c_onehot,
                    preferred_element_type=jnp.float32)       # (F, B_TILE)
    p_blk = jnp.dot(prodT_ref[...], p_onehot,
                    preferred_element_type=jnp.float32)       # (F, B_TILE)

    # Per-row dot product: one VPU multiply + one sublane reduce per tile.
    dots = jnp.sum(c_blk * p_blk, axis=0, keepdims=True)      # (1, B_TILE)

    out_ref[...] = dots * w_ref[0, 0] + b_ref[0]


# ----------------------------------------------------------------------------- helpers


def _pick_b_tile(batch, requested):
    """Batch tile: multiple of 128, as large as requested, but capped so that the
    'parallel' grid axis keeps >= 2 steps for modest batches (v7x has 2 TCs)."""
    requested = max(128, (int(requested) // 128) * 128)
    half = -(-batch // 2)                       # ceil(batch / 2)
    cap = max(128, ((half + 127) // 128) * 128)  # round up to multiple of 128
    return min(requested, cap)


def _vmem_limit_bytes(b_tile, table_bytes, v_c, v_p, n_factors, use_gram):
    """Estimate the VMEM footprint and clamp well below v7x's 64 MiB physical VMEM."""
    lane_row = b_tile * 4
    # 2 index inputs + 1 output, double-buffered by the pipeline.
    streams = 3 * 2 * lane_row
    # Tables are single-buffered (pl.Buffered(1)).
    tables = table_bytes
    if use_gram:
        scratch = (max(v_c, v_p) + v_p + v_c) * lane_row      # iota + p_onehot + G@p
    else:
        scratch = (max(v_c, v_p) + v_c + v_p + 2 * n_factors) * lane_row
    est = streams + tables + scratch
    # 2x headroom for Mosaic internal scratch; floor 16 MiB, ceiling 48 MiB (v7x-safe).
    return int(min(max(2 * est, 16 * 1024 * 1024), 48 * 1024 * 1024))


# ----------------------------------------------------------------------------- wrapper


def second_embedding_forward(x_idx, cust_table, prod_table, w, b, *,
                             b_tile=512, use_gram=None, table_dtype=jnp.float32):
    """x_idx: (B, 2) int; tables: (Vc, F), (Vp, F); w: (1, 1); b: (1,).

    table_dtype=jnp.bfloat16 gives the MXU-native bf16 path (halves table VMEM);
    one-hot values stay exact, only table entries are rounded.
    """
    batch = x_idx.shape[0]
    v_c, n_factors = cust_table.shape
    v_p = prod_table.shape[0]

    b_tile = _pick_b_tile(batch, b_tile)
    num_tiles = pl.cdiv(batch, b_tile)
    b_pad = num_tiles * b_tile
    pad = b_pad - batch

    # Lane-dense index rows, padded with 0 (a valid row id); padded lanes are
    # sliced off after the kernel.
    cust_idx = jnp.pad(x_idx[:, 0].astype(jnp.int32), (0, pad)).reshape(1, b_pad)
    prod_idx = jnp.pad(x_idx[:, 1].astype(jnp.int32), (0, pad)).reshape(1, b_pad)

    if use_gram is None:
        # Gram fusion wins when the gram matrix is smaller than the gather matmuls.
        use_gram = v_c * v_p < n_factors * (v_c + v_p)

    itemsize = jnp.dtype(table_dtype).itemsize
    idx_specs = [
        pl.BlockSpec((1, b_tile), lambda i: (0, i)),          # customer ids
        pl.BlockSpec((1, b_tile), lambda i: (0, i)),          # product ids
    ]
    smem_specs = [
        pl.BlockSpec(memory_space=pltpu.SMEM),                # weight (1, 1)
        pl.BlockSpec(memory_space=pltpu.SMEM),                # bias (1,)
    ]
    out_spec = pl.BlockSpec((1, b_tile), lambda i: (0, i))    # lane-dense output

    if use_gram:
        # Precompute G = cust @ prod.T once in XLA (f32), cast once for the kernel.
        gram = jnp.dot(cust_table.astype(jnp.float32),
                       prod_table.astype(jnp.float32).T).astype(table_dtype)  # (Vc, Vp)
        table_bytes = gram.size * itemsize
        kernel = _gram_dot_kernel
        table_specs = [
            pl.BlockSpec(gram.shape, lambda i: (0, 0),        # VMEM resident
                         pipeline_mode=pl.Buffered(1)),        # single-buffered
        ]
        table_args = (gram,)
    else:
        # Transpose once in XLA so factors sit on sublanes, vocab on lanes.
        custT = cust_table.astype(table_dtype).T              # (F, Vc)
        prodT = prod_table.astype(table_dtype).T              # (F, Vp)
        table_bytes = (custT.size + prodT.size) * itemsize
        kernel = _table_dot_kernel
        table_specs = [
            pl.BlockSpec(custT.shape, lambda i: (0, 0),
                         pipeline_mode=pl.Buffered(1)),
            pl.BlockSpec(prodT.shape, lambda i: (0, 0),
                         pipeline_mode=pl.Buffered(1)),
        ]
        table_args = (custT, prodT)

    vmem_limit = _vmem_limit_bytes(b_tile, table_bytes, v_c, v_p, n_factors, use_gram)

    grid_spec = pltpu.PrefetchScalarGridSpec(
        num_scalar_prefetch=0,
        grid=(num_tiles,),
        in_specs=idx_specs + table_specs + smem_specs,
        out_specs=out_spec,
    )

    out_row = pl.pallas_call(
        kernel,
        out_shape=jax.ShapeDtypeStruct((1, b_pad), jnp.float32),
        grid_spec=grid_spec,
        compiler_params=pltpu.CompilerParams(
            dimension_semantics=("parallel",),   # batch tiles are independent
            vmem_limit_bytes=vmem_limit,         # footprint-derived, v7x-safe
        ),
    )(cust_idx, prod_idx, *table_args,
      w.astype(jnp.float32), b.astype(jnp.float32))

    return out_row[0, :batch].reshape(batch, 1)


def second_embedding_reference(x_idx, cust_table, prod_table, w, b):
    custs = cust_table[x_idx[:, 0]]
    prods = prod_table[x_idx[:, 1]]
    dot = jnp.sum(custs * prods, axis=1, keepdims=True)
    return dot * w[0, 0] + b[0]


# ----------------------------------------------------------------------------- test


if __name__ == "__main__":
    # Small, module-consistent shapes.
    n_customers = 16
    n_products = 12
    n_factors = 32

    key = jax.random.PRNGKey(0)
    k_c, k_p, k_w, k_b = jax.random.split(key, 4)

    cust_table = jax.random.normal(k_c, (n_customers, n_factors), dtype=jnp.float32)
    prod_table = jax.random.normal(k_p, (n_products, n_factors), dtype=jnp.float32)
    # nn.Linear(1, 1): weight (1, 1), bias (1,) — deterministic synthetic init.
    w = jax.random.normal(k_w, (1, 1), dtype=jnp.float32)
    b = jax.random.normal(k_b, (1,), dtype=jnp.float32)

    def run_case(batch, **kw):
        k_case = jax.random.fold_in(key, batch)
        k_ci, k_pi = jax.random.split(k_case, 2)
        ci = jax.random.randint(k_ci, (batch,), 0, n_customers, dtype=jnp.int32)
        pi = jax.random.randint(k_pi, (batch,), 0, n_products, dtype=jnp.int32)
        x_idx = jnp.stack([ci, pi], axis=1)                    # (B, 2) int32
        out = second_embedding_forward(x_idx, cust_table, prod_table, w, b, **kw)
        out = jax.block_until_ready(out)
        ref = second_embedding_reference(x_idx, cust_table, prod_table, w, b)
        return out, ref

    # 1) Small batch, gram-fused path (auto-selected for these shapes).
    out, ref = run_case(8)
    assert out.shape == (8, 1)
    assert jnp.allclose(out, ref, atol=1e-5, rtol=1e-5), (out, ref)

    # 2) General one-hot table-gather path.
    out, ref = run_case(8, use_gram=False)
    assert jnp.allclose(out, ref, atol=1e-5, rtol=1e-5), (out, ref)

    # 3) Multi-tile grid with padded lanes (exercises tile-cap + grid > 1).
    out, ref = run_case(300, b_tile=128)
    assert out.shape == (300, 1)
    assert jnp.allclose(out, ref, atol=1e-5, rtol=1e-5)

    # 4) bf16 table path (MXU-native on v5e/v6e/v7x); table entries round to bf16,
    #    so use a loose tolerance here.
    out, ref = run_case(8, use_gram=False, table_dtype=jnp.bfloat16)
    assert jnp.allclose(out, ref, atol=2.5e-1, rtol=5e-2), (out, ref)

    print("KERNEL_OK")
</pallas_src>

<mosaic_0001>
module attributes {stable_mosaic.version = 11 : i64} {
  func.func @_gram_dot_kernel(%arg0: i32, %arg1: memref<1x128xi32, #tpu.memory_space<vmem>>, %arg2: memref<1x128xi32, #tpu.memory_space<vmem>>, %arg3: memref<16x12xf32, #tpu.memory_space<vmem>>, %arg4: memref<1x1xf32, #tpu.memory_space<smem>>, %arg5: memref<1xf32, #tpu.memory_space<smem>>, %arg6: memref<1x128xf32, #tpu.memory_space<vmem>>) attributes {dimension_semantics = [#tpu.dimension_semantics<parallel>], iteration_bounds = array<i64: 1>, scalar_prefetch = 0 : i64, scratch_operands = 0 : i64, tpu.core_type = #tpu.core_type<tc>, window_params = [{transform_indices = @transform_0, window_bounds = array<i64: 1, 128>}, {transform_indices = @transform_1, window_bounds = array<i64: 1, 128>}, {pipeline_mode = #tpu.pipeline_mode<synchronous>, transform_indices = @transform_2, window_bounds = array<i64: 16, 12>}, {transform_indices = @transform_3, window_bounds = array<i64: 1, 1>}, {transform_indices = @transform_4, window_bounds = array<i64: 1>}, {transform_indices = @transform_5, window_bounds = array<i64: 1, 128>}]} {
    %c0 = arith.constant 0 : index
    %c0_0 = arith.constant 0 : index
    %0 = vector.load %arg1[%c0, %c0_0] : memref<1x128xi32, #tpu.memory_space<vmem>>, vector<1x128xi32>
    %c0_1 = arith.constant 0 : index
    %c0_2 = arith.constant 0 : index
    %1 = vector.load %arg2[%c0_1, %c0_2] : memref<1x128xi32, #tpu.memory_space<vmem>>, vector<1x128xi32>
    %2 = tpu.iota {dimensions = array<i32: 0>} : vector<16x128xi32>
    %3 = vector.extract_strided_slice %2 {offsets = [0, 0], sizes = [12, 128], strides = [1, 1]} : vector<16x128xi32> to vector<12x128xi32>
    %4 = vector.broadcast %1 : vector<1x128xi32> to vector<12x128xi32>
    %5 = arith.cmpi eq, %3, %4 : vector<12x128xi32>
    %6 = arith.extui %5 : vector<12x128xi1> to vector<12x128xi32>
    %7 = arith.sitofp %6 : vector<12x128xi32> to vector<12x128xf32>
    %c0_3 = arith.constant 0 : index
    %c0_4 = arith.constant 0 : index
    %8 = vector.load %arg3[%c0_3, %c0_4] : memref<16x12xf32, #tpu.memory_space<vmem>>, vector<16x12xf32>
    %cst = arith.constant dense<0.000000e+00> : vector<16x128xf32>
    %9 = tpu.matmul %8, %7, %cst {dimension_numbers = #tpu.dot_dimension_numbers<[1], [0], [0], [1], [0, 0, 1, 1], [], []>} : vector<16x12xf32>, vector<12x128xf32>, vector<16x128xf32> -> vector<16x128xf32>
    %10 = vector.broadcast %0 : vector<1x128xi32> to vector<16x128xi32>
    %11 = arith.cmpi eq, %2, %10 : vector<16x128xi32>
    %cst_5 = arith.constant 0.000000e+00 : f32
    %12 = vector.broadcast %cst_5 : f32 to vector<16x128xf32>
    %13 = arith.select %11, %9, %12 : vector<16x128xi1>, vector<16x128xf32>
    %cst_6 = arith.constant dense<0.000000e+00> : vector<128xf32>
    %14 = vector.multi_reduction <add>, %13, %cst_6 [0] : vector<16x128xf32> to vector<128xf32>
    %15 = vector.shape_cast %14 : vector<128xf32> to vector<1x128xf32>
    %c0_7 = arith.constant 0 : index
    %c0_8 = arith.constant 0 : index
    %16 = memref.load %arg4[%c0_7, %c0_8] : memref<1x1xf32, #tpu.memory_space<smem>>
    %17 = vector.broadcast %16 : f32 to vector<1x128xf32>
    %18 = arith.mulf %15, %17 : vector<1x128xf32>
    %c0_9 = arith.constant 0 : index
    %19 = memref.load %arg5[%c0_9] : memref<1xf32, #tpu.memory_space<smem>>
    %20 = vector.broadcast %19 : f32 to vector<1x128xf32>
    %21 = arith.addf %18, %20 : vector<1x128xf32>
    %c0_10 = arith.constant 0 : index
    %c0_11 = arith.constant 0 : index
    %22 = vector.load %arg6[%c0_10, %c0_11] : memref<1x128xf32, #tpu.memory_space<vmem>>, vector<1x128xf32>
    tpu.vector_store %arg6[%c0_10, %c0_11], %21 {strides = array<i32>} : memref<1x128xf32, #tpu.memory_space<vmem>>, vector<1x128xf32>,
    return
  }
  func.func @transform_0(%arg0: i32) -> (i32, i32) {
    %c0_i32 = arith.constant 0 : i32
    %c0_i32_0 = arith.constant 0 : i32
    return %c0_i32, %arg0 : i32, i32
  }
  func.func @transform_1(%arg0: i32) -> (i32, i32) {
    %c0_i32 = arith.constant 0 : i32
    %c0_i32_0 = arith.constant 0 : i32
    return %c0_i32, %arg0 : i32, i32
  }
  func.func @transform_2(%arg0: i32) -> (i32, i32) {
    %c0_i32 = arith.constant 0 : i32
    %c0_i32_0 = arith.constant 0 : i32
    %c0_i32_1 = arith.constant 0 : i32
    return %c0_i32, %c0_i32_0 : i32, i32
  }
  func.func @transform_3(%arg0: i32) -> (i32, i32) {
    %c0_i32 = arith.constant 0 : i32
    %c0_i32_0 = arith.constant 0 : i32
    %c0_i32_1 = arith.constant 0 : i32
    return %c0_i32, %c0_i32_0 : i32, i32
  }
  func.func @transform_4(%arg0: i32) -> i32 {
    %c0_i32 = arith.constant 0 : i32
    %c0_i32_0 = arith.constant 0 : i32
    return %c0_i32 : i32
  }
  func.func @transform_5(%arg0: i32) -> (i32, i32) {
    %c0_i32 = arith.constant 0 : i32
    %c0_i32_0 = arith.constant 0 : i32
    return %c0_i32, %arg0 : i32, i32
  }
}

</mosaic_0001>

<llo_original>
// kernel: tpu_custom_call.1
$region0: #{tpu_custom_call.1}
  #allocation0 [shape = 'u32[]', space=smem, size = 0x4, offset = 0x4, fixed_abs, tag = 'smem constant byte address 0x4 - core index']
  #allocation1 [shape = 'u32[144,128]{1,0:T(1,128)}', space=vmem, size = 0x12000, scoped, tag = 'internal scratch']
  #allocation2 [shape = 'f32[1,1]{1,0:T(1,128)S(6)}', space=smem, size = 0x200, scoped, tag = 'scoped memory for tpu_custom_call.1']
  #allocation3 [shape = 'f32[1]{0:T(128)S(6)}', space=smem, size = 0x200, scoped, tag = 'scoped memory for tpu_custom_call.1']
  %s0 = inlined_call_operand.vmem [shape: s32[1,128], index: 0, kind: input, shape index: {}]
  %s1 = inlined_call_operand.vmem [shape: s32[1,128], index: 1, kind: input, shape index: {}]
  %s2 = inlined_call_operand.hbm [shape: f32[16,12], index: 2, kind: input, shape index: {}]
  %s3 = inlined_call_operand.<no memory space> [shape: f32[1,1], index: 3, kind: input, shape index: {}]
  %s4 = inlined_call_operand.<no memory space> [shape: f32[1], index: 4, kind: input, shape index: {}]
  %s5 = inlined_call_operand.hbm [shape: f32[1,128], index: 5, kind: output, shape index: {}]
  %s6 = sld [smem:[#allocation0]]
  $region34: #{tpu_custom_call.1} parent=0
    _
  %s8 = ssub.s32 1, %s6
  %s9 = scalar_select 0, %s8, %s6
  %10 = sst [smem:[#allocation2]] %s3
  %11 = sst [smem:[#allocation3]] %s4
  $region1: #{tpu_custom_call.1} parent=0
    #allocation4 [shape = 'u8[8192]{0}', space=vmem, size = 0x2000, scoped, tag = 'input window, operand 2, single buffered']
    #allocation5 [shape = 's32[1]{0}', space=sflag, size = 0x4, scoped, tag = 'scoped memory for tpu_custom_call.1']
    #allocation6 [shape = 's32[1]{0}', space=sflag, size = 0x4, scoped, tag = 'scoped memory for tpu_custom_call.1']
    #allocation7 [shape = 'u8[512]{0}', space=vmem, size = 0x400, scoped, tag = 'output window, operand 0, single buffered']
    %12 = vsyncpa [#allocation5], 0
    %13 = vsyncpa [#allocation6], 0
    // Predicated region
    $region2: #{tpu_custom_call.1} parent=1 // pred_check
      _
    $region3: #{tpu_custom_call.1} parent=1 // pred_check_branch
      %15 = sbr.rel (0) target = $region5
    $region4: #{tpu_custom_call.1} parent=1 // pred_region
      _
    $region5: #{tpu_custom_call.1} parent=1 // pred_fallthru
      _
    // Predicated region
    $region6: #{tpu_custom_call.1} parent=1 // pred_check
      _
    $region7: #{tpu_custom_call.1} parent=1 // pred_check_branch
      %17 = sbr.rel (0) target = $region9
    $region8: #{tpu_custom_call.1} parent=1 // pred_region
      _
    $region9: #{tpu_custom_call.1} parent=1 // pred_fallthru
      _
    // Predicated region
    $region10: #{tpu_custom_call.1} parent=1 // pred_check
      _
    $region11: #{tpu_custom_call.1} parent=1 // pred_check_branch
      %19 = sbr.rel (0) target = $region13
    $region12: #{tpu_custom_call.1} parent=1 // pred_region
      %s21 = ssub.s32 256, 256
      %22 = vsyncadd [#allocation5], %s21
      %s23 = sshll.u32 [#allocation4], 4
      %s24 = int_to_ptr.vmem [resolvable:$true] %s23
      %29 = dma.hbm_to_vmem [thread:$0]  %s2, 256, %s24, [#allocation5], 128, 128, 8
    $region13: #{tpu_custom_call.1} parent=1 // pred_fallthru
      _
    // Predicated region
    $region14: #{tpu_custom_call.1} parent=1 // pred_check
      _
    $region15: #{tpu_custom_call.1} parent=1 // pred_check_branch
      %31 = sbr.rel (0) target = $region17
    $region16: #{tpu_custom_call.1} parent=1 // pred_region
      _
    $region17: #{tpu_custom_call.1} parent=1 // pred_fallthru
      _
    // Predicated region
    $region18: #{tpu_custom_call.1} parent=1 // pred_check
      _
    $region19: #{tpu_custom_call.1} parent=1 // pred_check_branch
      %33 = sbr.rel (0) target = $region21
    $region20: #{tpu_custom_call.1} parent=1 // pred_region
      _
    $region21: #{tpu_custom_call.1} parent=1 // pred_fallthru
      _
    // Predicated region
    $region22: #{tpu_custom_call.1} parent=1 // pred_check
      _
    $region23: #{tpu_custom_call.1} parent=1 // pred_check_branch
      %35 = sbr.rel (0) target = $region25
    $region24: #{tpu_custom_call.1} parent=1 // pred_region
      %36 = dma.done [#allocation5], 256
    $region25: #{tpu_custom_call.1} parent=1 // pred_fallthru
      _
    %v37 = vld [vmem:[%s0] sm:$0x1]
    %v38 = vld [vmem:[%s1] sm:$0x1]
    %v39 = vlaneseq
    %v40 = vshrl.u32 %v39, 7
    %v41 = vadd.s32 %v40, 8
    %v42 = vlaneseq
    %v43 = vshrl.u32 %v42, 7
    %v44 = vsub.s32 0, %v43
    %v45 = vrot.slane %v38, %v44
    %vm46 = vcmp.eq.s32.totalorder %v40, %v45
    %vm47 = vcmp.eq.s32.totalorder %v41, %v45
    %v48 = vsel %vm46, 1, 0
    %v49 = vsel %vm47, 1, 0
    %v50 = vcvt.s32.f32 %v48
    %v51 = vcvt.s32.f32 %v49
    %v52 = vld [vmem:[#allocation4] sm:$0xff]
    %v53 = vld [vmem:[#allocation4 + $0x8] sm:$0xff]
    %vm54 = vcmask 97280
    %v56 = vsel %vm54, %v52, 0
    %v59 = vsel %vm54, %v53, 0
    %vm61 = vcmask 1043456
    %v63 = vsel %vm61, %v51, 0
    %65 = vmatprep.subr.mxu0 0.0
    %66 = vmatpush1.msra.mxu0 %v50
    %67 = vmatprep.subr.mxu0 0.0
    %68 = vmatpush1.msra.mxu0 %v63
    %69 = vmatprep.subr.mxu0 0.0
    %70 = vmatpush1.msra.mxu0 0.0
    %71 = vmatprep.subr.mxu0 0.0
    %72 = vmatpush1.msra.mxu0 0.0
    %73 = vmatprep.subr.mxu0 0.0
    %74 = vmatpush1.msra.mxu0 0.0
    %75 = vmatprep.subr.mxu0 0.0
    %76 = vmatpush1.msra.mxu0 0.0
    %77 = vmatprep.subr.mxu0 0.0
    %78 = vmatpush1.msra.mxu0 0.0
    %79 = vmatprep.subr.mxu0 0.0
    %80 = vmatpush1.msra.mxu0 0.0
    %81 = vmatprep.subr.mxu0 0.0
    %82 = vmatpush1.msra.mxu0 0.0
    %83 = vmatprep.subr.mxu0 0.0
    %84 = vmatpush1.msra.mxu0 0.0
    %85 = vmatprep.subr.mxu0 0.0
    %86 = vmatpush1.msra.mxu0 0.0
    %87 = vmatprep.subr.mxu0 0.0
    %88 = vmatpush1.msra.mxu0 0.0
    %89 = vmatprep.subr.mxu0 0.0
    %90 = vmatpush1.msra.mxu0 0.0
    %91 = vmatprep.subr.mxu0 0.0
    %92 = vmatpush1.msra.mxu0 0.0
    %93 = vmatprep.subr.mxu0 0.0
    %94 = vmatpush1.msra.mxu0 0.0
    %95 = vmatprep.subr.mxu0 0.0
    %96 = vmatpush1.msra.mxu0 0.0
    %97 = vmatprep.subr.mxu0 0.0
    %98 = vmatpush1.msra.mxu0 0.0
    %99 = vmatprep.subr.mxu0 0.0
    %100 = vmatpush1.msra.mxu0 0.0
    %101 = vmatprep.subr.mxu0 0.0
    %102 = vmatpush1.msra.mxu0 0.0
    %103 = vmatprep.subr.mxu0 0.0
    %104 = vmatpush1.msra.mxu0 0.0
    %105 = vmatprep.subr.mxu0 0.0
    %106 = vmatpush1.msra.mxu0 0.0
    %107 = vmatprep.subr.mxu0 0.0
    %108 = vmatpush1.msra.mxu0 0.0
    %109 = vmatprep.subr.mxu0 0.0
    %110 = vmatpush1.msra.mxu0 0.0
    %111 = vmatprep.subr.mxu0 0.0
    %112 = vmatpush1.msra.mxu0 0.0
    %113 = vmatprep.subr.mxu0 0.0
    %114 = vmatpush1.msra.mxu0 0.0
    %115 = vmatprep.subr.mxu0 0.0
    %116 = vmatpush1.msra.mxu0 0.0
    %117 = vmatprep.subr.mxu0 0.0
    %118 = vmatpush1.msra.mxu0 0.0
    %119 = vmatprep.subr.mxu0 0.0
    %120 = vmatpush1.msra.mxu0 0.0
    %121 = vmatprep.subr.mxu0 0.0
    %122 = vmatpush1.msra.mxu0 0.0
    %123 = vmatprep.subr.mxu0 0.0
    %124 = vmatpush1.msra.mxu0 0.0
    %125 = vmatprep.subr.mxu0 0.0
    %126 = vmatpush1.msra.mxu0 0.0
    %127 = vmatprep.subr.mxu0 0.0
    %128 = vmatpush1.msra.mxu0 0.0
    %129 = vmatprep.mubr.f32.mxu0 0.0
    %130 = vmatmul.mubr.f32.gmra.mrb[0].mxu0 %v56
    %v131 = vpop.f32.mrb[0].mxu0
    %v132 = vadd.f32 0.0, %v131
    %v133 = vpop.f32.mrb[0].mxu0
    %134 = vmatprep.mubr.f32.mxu0 0.0
    %135 = vmatmul.mubr.f32.gmra.mrb[0].mxu0 %v59
    %v136 = vpop.f32.mrb[0].mxu0
    %v137 = vadd.f32 0.0, %v136
    %v138 = vpop.f32.mrb[0].mxu0
    %139 = vdwg.mxu0
    %v140 = vlaneseq
    %v141 = vshrl.u32 %v140, 7
    %v142 = vsub.s32 0, %v141
    %v143 = vrot.slane %v37, %v142
    %vm144 = vcmp.eq.s32.totalorder %v40, %v143
    %vm145 = vcmp.eq.s32.totalorder %v41, %v143
    %v146 = vsel %vm144, %v132, 0.0
    %v147 = vsel %vm145, %v137, 0.0
    %v148 = vadd.f32 %v146, %v147
    %v149 = vrot.slane %v148, 4
    %v150 = vadd.f32 %v148, %v149
    %v151 = vrot.slane %v150, 2
    %v152 = vadd.f32 %v150, %v151
    %v153 = vrot.slane %v152, 1
    %v154 = vadd.f32 %v152, %v153
    %s155 = sld [smem:[#allocation2]]
    %v156 = vstv %s155
    %v157 = vmul.f32 %v154, %v156
    %s158 = sld [smem:[#allocation3]]
    %v159 = vstv %s158
    %v160 = vadd.f32 %v157, %v159
    %161 = vst [vmem:[#allocation7] sm:$0x1] %v160
    // Predicated region
    $region26: #{tpu_custom_call.1} parent=1 // pred_check
      _
    $region27: #{tpu_custom_call.1} parent=1 // pred_check_branch
      %163 = sbr.rel (0) target = $region29
    $region28: #{tpu_custom_call.1} parent=1 // pred_region
      %s165 = ssub.s32 16, 16
      %166 = vsyncadd [#allocation6], %s165
      %s168 = sshll.u32 [#allocation7], 4
      %s169 = int_to_ptr.vmem [resolvable:$true] %s168
      %171 = dma.vmem_to_hbm [thread:$0]  %s169, 16, %s5, [#allocation6]
    $region29: #{tpu_custom_call.1} parent=1 // pred_fallthru
      _
    // Predicated region
    $region30: #{tpu_custom_call.1} parent=1 // pred_check
      _
    $region31: #{tpu_custom_call.1} parent=1 // pred_check_branch
      %173 = sbr.rel (0) target = $region33
    $region32: #{tpu_custom_call.1} parent=1 // pred_region
      %174 = dma.done [#allocation6], 16
    $region33: #{tpu_custom_call.1} parent=1 // pred_fallthru
      _
    %175 = vsyncpa [#allocation5], 1
    %176 = vsyncpa [#allocation6], 1

</llo_original>
